<compile_context>
chip_gen: v6e
topology: v6e:2x2x1
jax: 0.10.0
libtpu: 0.0.40
codegen_flags: <defaults>
</compile_context>

<pallas_src>
import jax
import jax.numpy as jnp
from jax.experimental import pallas as pl
from jax.experimental.pallas import tpu as pltpu


def _round_up(x, m):
    return ((x + m - 1) // m) * m


def _fused_mlp_kernel(seg_ref, x_ref, w1_ref, b1_ref, w2_ref, b2_ref, o_ref):
    """One row-tile of: relu(x @ W1[s] + b1[s]) @ W2[s] + b2[s].

    The segment id s was already consumed by the weight BlockSpecs' index_maps
    (scalar prefetch), so the body just sees the correct weight slab.
    """
    del seg_ref  # only used by the index_maps
    x = x_ref[...]                       # [tile_m, Din_pad]
    w1 = w1_ref[0]                       # [Din_pad, H_pad]
    b1 = b1_ref[0]                       # [1, H_pad]
    w2 = w2_ref[0]                       # [H_pad, Dout_pad]
    b2 = b2_ref[0]                       # [1, Dout_pad]

    h = jnp.dot(x, w1, preferred_element_type=jnp.float32) + b1.astype(jnp.float32)
    h = jnp.maximum(h, 0.0).astype(w2.dtype)
    y = jnp.dot(h, w2, preferred_element_type=jnp.float32) + b2.astype(jnp.float32)
    o_ref[...] = y.astype(o_ref.dtype)


def fused_graph_independent_forward(tensors, w1_stack, b1_stack, w2_stack, b2_stack,
                                    out_dims, *, tile_m=256,
                                    compute_dtype=jnp.float32, out_dtype=None):
    """Apply per-segment MLPs to a list of [rows_s, d_in_s] tensors in one pallas_call."""
    if out_dtype is None:
        out_dtype = compute_dtype
    num_seg, din_pad, h_pad = w1_stack.shape
    dout_pad = w2_stack.shape[2]
    assert len(tensors) == num_seg

    rows = [int(t.shape[0]) for t in tensors]
    rows_pad = [_round_up(max(r, 1), tile_m) for r in rows]

    xs, seg_ids = [], []
    for s, (t, rp) in enumerate(zip(tensors, rows_pad)):
        t = t.astype(compute_dtype)
        xs.append(jnp.pad(t, ((0, rp - t.shape[0]), (0, din_pad - t.shape[1]))))
        seg_ids.append(jnp.full((rp // tile_m,), s, jnp.int32))
    x_cat = jnp.concatenate(xs, axis=0)            # [sum(rows_pad), Din_pad]
    seg_tbl = jnp.concatenate(seg_ids, axis=0)     # [num_tiles] int32 (SMEM prefetch)
    num_tiles = x_cat.shape[0] // tile_m

    out = pl.pallas_call(
        _fused_mlp_kernel,
        out_shape=jax.ShapeDtypeStruct((x_cat.shape[0], dout_pad), out_dtype),
        grid_spec=pltpu.PrefetchScalarGridSpec(
            num_scalar_prefetch=1,
            grid=(num_tiles,),
            in_specs=[
                # activations: lane-dense row tile per grid step
                pl.BlockSpec((tile_m, din_pad), lambda i, seg: (i, 0)),
                # per-segment weights, selected via the scalar-prefetched table
                pl.BlockSpec((1, din_pad, h_pad), lambda i, seg: (seg[i], 0, 0)),
                pl.BlockSpec((1, 1, h_pad), lambda i, seg: (seg[i], 0, 0)),
                pl.BlockSpec((1, h_pad, dout_pad), lambda i, seg: (seg[i], 0, 0)),
                pl.BlockSpec((1, 1, dout_pad), lambda i, seg: (seg[i], 0, 0)),
            ],
            out_specs=pl.BlockSpec((tile_m, dout_pad), lambda i, seg: (i, 0)),
        ),
        compiler_params=pltpu.CompilerParams(
            dimension_semantics=("parallel",)),
    )(seg_tbl, x_cat, w1_stack, b1_stack, w2_stack, b2_stack)

    # Un-pad: slice each segment's real rows and real output width.
    outs, off = [], 0
    for r, rp, d_out in zip(rows, rows_pad, out_dims):
        outs.append(out[off:off + r, :d_out])
        off += rp
    return outs


def _init_mlp_params(key, d_in, d_hidden, d_out, dtype=jnp.float32):
    k1, k2 = jax.random.split(key)
    scale1 = 1.0 / jnp.sqrt(jnp.asarray(d_in, dtype))
    scale2 = 1.0 / jnp.sqrt(jnp.asarray(d_hidden, dtype))
    w1 = jax.random.normal(k1, (d_in, d_hidden), dtype) * scale1
    b1 = jnp.zeros((d_hidden,), dtype)
    w2 = jax.random.normal(k2, (d_hidden, d_out), dtype) * scale2
    b2 = jnp.zeros((d_out,), dtype)
    return dict(w1=w1, b1=b1, w2=w2, b2=b2)


class MLPGraphIndependent:
    """GraphIndependent with MLP edge, node, and global models (fused Pallas TPU)."""

    def __init__(self, edge_model_info, node_model_info, global_model_info, key,
                 *, compute_dtype=jnp.float32, tile_m=256):
        # compute_dtype=jnp.bfloat16 is recommended on v6e/v7x (f32 accumulate kept).
        self.infos = [tuple(edge_model_info), tuple(node_model_info),
                      tuple(global_model_info)]
        self.compute_dtype = compute_dtype
        self.tile_m = tile_m

        ke, kn, kg = jax.random.split(key, 3)
        self.params = [_init_mlp_params(k, *info)
                       for k, info in zip((ke, kn, kg), self.infos)]
        self.edge_params, self.node_params, self.global_params = self.params

        # Lane-pad every feature dim to a multiple of 128 and stack the three
        # models' weights so the kernel can select them by segment id.
        self.din_pad = _round_up(max(i[0] for i in self.infos), 128)
        self.h_pad = _round_up(max(i[1] for i in self.infos), 128)
        self.dout_pad = _round_up(max(i[2] for i in self.infos), 128)

        def pad2(a, r, c):
            return jnp.pad(a, ((0, r - a.shape[0]), (0, c - a.shape[1])))

        self.w1_stack = jnp.stack(
            [pad2(p["w1"], self.din_pad, self.h_pad) for p in self.params]
        ).astype(compute_dtype)                                   # [3, Din_pad, H_pad]
        self.b1_stack = jnp.stack(
            [pad2(p["b1"].reshape(1, -1), 1, self.h_pad) for p in self.params]
        ).astype(compute_dtype)                                   # [3, 1, H_pad]
        self.w2_stack = jnp.stack(
            [pad2(p["w2"], self.h_pad, self.dout_pad) for p in self.params]
        ).astype(compute_dtype)                                   # [3, H_pad, Dout_pad]
        self.b2_stack = jnp.stack(
            [pad2(p["b2"].reshape(1, -1), 1, self.dout_pad) for p in self.params]
        ).astype(compute_dtype)                                   # [3, 1, Dout_pad]

    def __call__(self, graph):
        new_edges, new_nodes, new_globals = fused_graph_independent_forward(
            [graph["edges"], graph["nodes"], graph["globals"]],
            self.w1_stack, self.b1_stack, self.w2_stack, self.b2_stack,
            out_dims=[i[2] for i in self.infos],
            tile_m=self.tile_m, compute_dtype=self.compute_dtype)
        out = dict(graph)
        out["edges"] = new_edges
        out["nodes"] = new_nodes
        out["globals"] = new_globals
        return out


def _reference_mlp(x, p):
    h = jnp.maximum(x @ p["w1"] + p["b1"], 0.0)
    return h @ p["w2"] + p["b2"]


if __name__ == "__main__":
    key = jax.random.PRNGKey(0)
    k_params, k_nodes, k_edges, k_glob = jax.random.split(key, 4)

    # Small synthetic graph: 2 graphs batched together.
    num_nodes, node_dim = 10, 8
    num_edges, edge_dim = 14, 6
    num_graphs, global_dim = 2, 4
    hidden = 32
    out_dim = 16

    graph = {
        "nodes": jax.random.normal(k_nodes, (num_nodes, node_dim), jnp.float32),
        "edges": jax.random.normal(k_edges, (num_edges, edge_dim), jnp.float32),
        "globals": jax.random.normal(k_glob, (num_graphs, global_dim), jnp.float32),
        "senders": jnp.arange(num_edges, dtype=jnp.int32) % num_nodes,
        "receivers": (jnp.arange(num_edges, dtype=jnp.int32) + 1) % num_nodes,
        "n_node": jnp.array([5, 5], jnp.int32),
        "n_edge": jnp.array([7, 7], jnp.int32),
    }

    model = MLPGraphIndependent(
        edge_model_info=(edge_dim, hidden, out_dim),
        node_model_info=(node_dim, hidden, out_dim),
        global_model_info=(global_dim, hidden, out_dim),
        key=k_params,
    )

    out = model(graph)
    jax.block_until_ready(out)

    # Correctness check against pure-JAX reference (f32 compute path).
    ref_edges = _reference_mlp(graph["edges"], model.edge_params)
    ref_nodes = _reference_mlp(graph["nodes"], model.node_params)
    ref_globals = _reference_mlp(graph["globals"], model.global_params)
    assert jnp.allclose(out["edges"], ref_edges, atol=1e-4, rtol=1e-4)
    assert jnp.allclose(out["nodes"], ref_nodes, atol=1e-4, rtol=1e-4)
    assert jnp.allclose(out["globals"], ref_globals, atol=1e-4, rtol=1e-4)
    assert out["edges"].shape == (num_edges, out_dim)
    assert out["nodes"].shape == (num_nodes, out_dim)
    assert out["globals"].shape == (num_graphs, out_dim)

    print("KERNEL_OK")
</pallas_src>

<mosaic_0001>
module attributes {stable_mosaic.version = 11 : i64} {
  func.func @_fused_mlp_kernel(%arg0: i32, %arg1: memref<3xi32, #tpu.memory_space<smem>>, %arg2: memref<256x128xf32, #tpu.memory_space<vmem>>, %arg3: memref<1x128x128xf32, #tpu.memory_space<vmem>>, %arg4: memref<1x1x128xf32, #tpu.memory_space<vmem>>, %arg5: memref<1x128x128xf32, #tpu.memory_space<vmem>>, %arg6: memref<1x1x128xf32, #tpu.memory_space<vmem>>, %arg7: memref<256x128xf32, #tpu.memory_space<vmem>>) attributes {dimension_semantics = [#tpu.dimension_semantics<parallel>], iteration_bounds = array<i64: 3>, scalar_prefetch = 1 : i64, scratch_operands = 0 : i64, tpu.core_type = #tpu.core_type<tc>, window_params = [{transform_indices = @transform_0, window_bounds = array<i64: 256, 128>}, {transform_indices = @transform_1, window_bounds = array<i64: 1, 128, 128>}, {transform_indices = @transform_2, window_bounds = array<i64: 1, 1, 128>}, {transform_indices = @transform_3, window_bounds = array<i64: 1, 128, 128>}, {transform_indices = @transform_4, window_bounds = array<i64: 1, 1, 128>}, {transform_indices = @transform_5, window_bounds = array<i64: 256, 128>}]} {
    %c0 = arith.constant 0 : index
    %c0_0 = arith.constant 0 : index
    %0 = vector.load %arg2[%c0, %c0_0] : memref<256x128xf32, #tpu.memory_space<vmem>>, vector<256x128xf32>
    %c0_1 = arith.constant 0 : index
    %c0_2 = arith.constant 0 : index
    %c0_3 = arith.constant 0 : index
    %1 = vector.load %arg3[%c0_1, %c0_2, %c0_3] : memref<1x128x128xf32, #tpu.memory_space<vmem>>, vector<1x128x128xf32>
    %2 = vector.shape_cast %1 : vector<1x128x128xf32> to vector<128x128xf32>
    %c0_4 = arith.constant 0 : index
    %c0_5 = arith.constant 0 : index
    %c0_6 = arith.constant 0 : index
    %3 = vector.load %arg4[%c0_4, %c0_5, %c0_6] : memref<1x1x128xf32, #tpu.memory_space<vmem>>, vector<1x1x128xf32>
    %4 = vector.shape_cast %3 : vector<1x1x128xf32> to vector<1x128xf32>
    %c0_7 = arith.constant 0 : index
    %c0_8 = arith.constant 0 : index
    %c0_9 = arith.constant 0 : index
    %5 = vector.load %arg5[%c0_7, %c0_8, %c0_9] : memref<1x128x128xf32, #tpu.memory_space<vmem>>, vector<1x128x128xf32>
    %6 = vector.shape_cast %5 : vector<1x128x128xf32> to vector<128x128xf32>
    %c0_10 = arith.constant 0 : index
    %c0_11 = arith.constant 0 : index
    %c0_12 = arith.constant 0 : index
    %7 = vector.load %arg6[%c0_10, %c0_11, %c0_12] : memref<1x1x128xf32, #tpu.memory_space<vmem>>, vector<1x1x128xf32>
    %8 = vector.shape_cast %7 : vector<1x1x128xf32> to vector<1x128xf32>
    %cst = arith.constant dense<0.000000e+00> : vector<256x128xf32>
    %9 = tpu.matmul %0, %2, %cst {dimension_numbers = #tpu.dot_dimension_numbers<[1], [0], [0], [1], [0, 0, 1, 1], [], []>} : vector<256x128xf32>, vector<128x128xf32>, vector<256x128xf32> -> vector<256x128xf32>
    %10 = vector.broadcast %4 : vector<1x128xf32> to vector<256x128xf32>
    %11 = arith.addf %9, %10 : vector<256x128xf32>
    %cst_13 = arith.constant 0.000000e+00 : f32
    %12 = vector.broadcast %cst_13 : f32 to vector<256x128xf32>
    %13 = arith.maximumf %11, %12 : vector<256x128xf32>
    %cst_14 = arith.constant dense<0.000000e+00> : vector<256x128xf32>
    %14 = tpu.matmul %13, %6, %cst_14 {dimension_numbers = #tpu.dot_dimension_numbers<[1], [0], [0], [1], [0, 0, 1, 1], [], []>} : vector<256x128xf32>, vector<128x128xf32>, vector<256x128xf32> -> vector<256x128xf32>
    %15 = vector.broadcast %8 : vector<1x128xf32> to vector<256x128xf32>
    %16 = arith.addf %14, %15 : vector<256x128xf32>
    %c0_15 = arith.constant 0 : index
    %c0_16 = arith.constant 0 : index
    %17 = vector.load %arg7[%c0_15, %c0_16] : memref<256x128xf32, #tpu.memory_space<vmem>>, vector<256x128xf32>
    tpu.vector_store %arg7[%c0_15, %c0_16], %16 {strides = array<i32>} : memref<256x128xf32, #tpu.memory_space<vmem>>, vector<256x128xf32>,
    return
  }
  func.func @transform_0(%arg0: i32, %arg1: memref<3xi32, #tpu.memory_space<smem>>) -> (i32, i32) {
    %c0_i32 = arith.constant 0 : i32
    %c0_i32_0 = arith.constant 0 : i32
    return %arg0, %c0_i32 : i32, i32
  }
  func.func @transform_1(%arg0: i32, %arg1: memref<3xi32, #tpu.memory_space<smem>>) -> (i32, i32, i32) {
    %0 = arith.index_cast %arg0 : i32 to index
    %1 = memref.load %arg1[%0] : memref<3xi32, #tpu.memory_space<smem>>
    %c0_i32 = arith.constant 0 : i32
    %c0_i32_0 = arith.constant 0 : i32
    %c0_i32_1 = arith.constant 0 : i32
    return %1, %c0_i32, %c0_i32_0 : i32, i32, i32
  }
  func.func @transform_2(%arg0: i32, %arg1: memref<3xi32, #tpu.memory_space<smem>>) -> (i32, i32, i32) {
    %0 = arith.index_cast %arg0 : i32 to index
    %1 = memref.load %arg1[%0] : memref<3xi32, #tpu.memory_space<smem>>
    %c0_i32 = arith.constant 0 : i32
    %c0_i32_0 = arith.constant 0 : i32
    %c0_i32_1 = arith.constant 0 : i32
    return %1, %c0_i32, %c0_i32_0 : i32, i32, i32
  }
  func.func @transform_3(%arg0: i32, %arg1: memref<3xi32, #tpu.memory_space<smem>>) -> (i32, i32, i32) {
    %0 = arith.index_cast %arg0 : i32 to index
    %1 = memref.load %arg1[%0] : memref<3xi32, #tpu.memory_space<smem>>
    %c0_i32 = arith.constant 0 : i32
    %c0_i32_0 = arith.constant 0 : i32
    %c0_i32_1 = arith.constant 0 : i32
    return %1, %c0_i32, %c0_i32_0 : i32, i32, i32
  }
  func.func @transform_4(%arg0: i32, %arg1: memref<3xi32, #tpu.memory_space<smem>>) -> (i32, i32, i32) {
    %0 = arith.index_cast %arg0 : i32 to index
    %1 = memref.load %arg1[%0] : memref<3xi32, #tpu.memory_space<smem>>
    %c0_i32 = arith.constant 0 : i32
    %c0_i32_0 = arith.constant 0 : i32
    %c0_i32_1 = arith.constant 0 : i32
    return %1, %c0_i32, %c0_i32_0 : i32, i32, i32
  }
  func.func @transform_5(%arg0: i32, %arg1: memref<3xi32, #tpu.memory_space<smem>>) -> (i32, i32) {
    %c0_i32 = arith.constant 0 : i32
    %c0_i32_0 = arith.constant 0 : i32
    return %arg0, %c0_i32 : i32, i32
  }
}

</mosaic_0001>

<llo_original>
// kernel: tpu_custom_call.1
$region0: #{tpu_custom_call.1}
  #allocation0 [shape = 'u32[]', space=smem, size = 0x4, offset = 0x4, fixed_abs, tag = 'smem constant byte address 0x4 - core index']
  #allocation1 [shape = 'u32[144,128]{1,0:T(1,128)}', space=vmem, size = 0x12000, scoped, tag = 'internal scratch']
  #allocation2 [shape = 's32[1]{0}', space=sflag, size = 0x4, scoped, tag = 'scoped memory for tpu_custom_call.1']
  #allocation3 [shape = 'u8[512]{0}', space=smem, size = 0x200, scoped, tag = 'prefetched SMEM operand 0']
  %s0 = inlined_call_operand.hbm [shape: s32[3], index: 0, kind: input, shape index: {}]
  %s1 = inlined_call_operand.hbm [shape: f32[768,128], index: 1, kind: input, shape index: {}]
  %s2 = inlined_call_operand.hbm [shape: f32[3,128,128], index: 2, kind: input, shape index: {}]
  %s3 = inlined_call_operand.vmem [shape: f32[3,1,128], index: 3, kind: input, shape index: {}]
  %s4 = inlined_call_operand.hbm [shape: f32[3,128,128], index: 4, kind: input, shape index: {}]
  %s5 = inlined_call_operand.vmem [shape: f32[3,1,128], index: 5, kind: input, shape index: {}]
  %s6 = inlined_call_operand.hbm [shape: f32[768,128], index: 6, kind: output, shape index: {}]
  %s7 = sld [smem:[#allocation0]]
  $region65: #{tpu_custom_call.1} parent=0
    _
  %s9 = ssub.s32 1, %s7
  %s10 = scalar_select 0, %s9, %s7
  %12 = dma.hbm_to_smem %s0, 16, [#allocation3], [#allocation2]
  %13 = dma.done [#allocation2], 16
  %14 = sfence
  $region1: #{tpu_custom_call.1} parent=0
    #allocation4 [shape = 'u8[262144]{0}', space=vmem, size = 0x40000, scoped, tag = 'input window, operand 1']
    #allocation5 [shape = 's32[2]{0}', space=sflag, size = 0x8, scoped, tag = 'scoped memory for tpu_custom_call.1']
    #allocation6 [shape = 's32[2]{0}', space=sflag, size = 0x8, scoped, tag = 'scoped memory for tpu_custom_call.1']
    #allocation7 [shape = 'u8[131072]{0}', space=vmem, size = 0x20000, scoped, tag = 'input window, operand 2']
    #allocation8 [shape = 's32[2]{0}', space=sflag, size = 0x8, scoped, tag = 'scoped memory for tpu_custom_call.1']
    #allocation9 [shape = 'u8[131072]{0}', space=vmem, size = 0x20000, scoped, tag = 'input window, operand 4']
    #allocation10 [shape = 'u8[262144]{0}', space=vmem, size = 0x40000, scoped, tag = 'output window, operand 0']
    %15 = vsyncpa [#allocation5], 0
    %s16 = scalar_lea.sflag [#allocation5], 1
    %17 = vsyncpa %s16, 0
    %18 = vsyncpa [#allocation8], 0
    %s19 = scalar_lea.sflag [#allocation8], 1
    %20 = vsyncpa %s19, 0
    %21 = vsyncpa [#allocation6], 0
    %s22 = scalar_lea.sflag [#allocation6], 1
    %23 = vsyncpa %s22, 0
    loop: start=0, step=1, limit=5
    $region2: #{tpu_custom_call.1} parent=1 // loop_pre_header
      _
    $region3: #{tpu_custom_call.1} parent=1 // loop_header
      %s25 = sphi 0, %s29
      %p26 = scmp.ge.s32.totalorder %s25, 5
      %s35 = sphi 0, %s37
      %s38 = sphi 0, %s35
      %s39 = sphi 0, %s38
      %s55 = sphi 0, %s39
      %s63 = sphi 0, %s65
      %s66 = sphi 0, %s63
      %s67 = sphi 0, %s66
      %s83 = sphi 0, %s67
      %s91 = sphi 0, %s93
      %s94 = sphi 0, %s91
      %s95 = sphi 0, %s94
      %s111 = sphi 0, %s95
      %s119 = sphi 0, %s121
      %s122 = sphi 0, %s119
      %s123 = sphi 0, %s122
      %s139 = sphi 0, %s123
      %s147 = sphi 0, %s149
      %s150 = sphi 0, %s147
      %s151 = sphi 0, %s150
      %s167 = sphi 0, %s151
      %s173 = sphi 0, %s175
      %s176 = sphi 0, %s173
      %s177 = sphi 0, %s176
      %s193 = sphi 0, %s177
    $region4: #{tpu_custom_call.1} parent=1 // loop_header_branch
      %28 = sbr.rel (%p26) target = $region8
    $region5: #{tpu_custom_call.1} parent=1 // loop_body
      %s30 = ssub.s32 %s25, 1
      %s31 = ssub.s32 %s25, 2
      %s32 = sadd.s32 %s25, 1
      %s33 = ssub.s32 %s25, %s32
      %p34 = scmp.eq.s32.totalorder %s33, 0
      %s36 = sadd.s32 %s35, 1
      %s37 = scalar_select %p34, %s35, %s36
      %p40 = pneg %p34
      %p41 = scmp.eq.s32.totalorder %s25, 2
      %p42 = por %p40, %p41
      %p43 = scmp.ne.s32.totalorder %s35, %s38
      %p44 = scmp.eq.s32.totalorder %s25, 0
      %p45 = por %p43, %p44
      %p46 = scmp.ne.s32.totalorder %s35, %s38
      %p47 = scmp.eq.s32.totalorder %s30, 2
      %p48 = por %p46, %p47
      %p49 = scmp.ne.s32.totalorder %s38, %s39
      %p50 = scmp.eq.s32.totalorder %s30, 0
      %p51 = por %p49, %p50
      %p52 = scmp.ne.s32.totalorder %s38, %s39
      %p53 = scmp.eq.s32.totalorder %s31, 2
      %p54 = por %p52, %p53
      %p56 = scmp.ne.s32.totalorder %s39, %s55
      %p57 = scmp.eq.s32.totalorder %s31, 0
      %p58 = por %p56, %p57
      %s59 = sld [smem:[#allocation3 + %s25]]
      %s60 = sld [smem:[#allocation3 + %s32]]
      %s61 = ssub.s32 %s59, %s60
      %p62 = scmp.eq.s32.totalorder %s61, 0
      %s64 = sadd.s32 %s63, 1
      %s65 = scalar_select %p62, %s63, %s64
      %p68 = pneg %p62
      %p69 = scmp.eq.s32.totalorder %s25, 2
      %p70 = por %p68, %p69
      %p71 = scmp.ne.s32.totalorder %s63, %s66
      %p72 = scmp.eq.s32.totalorder %s25, 0
      %p73 = por %p71, %p72
      %p74 = scmp.ne.s32.totalorder %s63, %s66
      %p75 = scmp.eq.s32.totalorder %s30, 2
      %p76 = por %p74, %p75
      %p77 = scmp.ne.s32.totalorder %s66, %s67
      %p78 = scmp.eq.s32.totalorder %s30, 0
      %p79 = por %p77, %p78
      %p80 = scmp.ne.s32.totalorder %s66, %s67
      %p81 = scmp.eq.s32.totalorder %s31, 2
      %p82 = por %p80, %p81
      %p84 = scmp.ne.s32.totalorder %s67, %s83
      %p85 = scmp.eq.s32.totalorder %s31, 0
      %p86 = por %p84, %p85
      %s87 = sld [smem:[#allocation3 + %s25]]
      %s88 = sld [smem:[#allocation3 + %s32]]
      %s89 = ssub.s32 %s87, %s88
      %p90 = scmp.eq.s32.totalorder %s89, 0
      %s92 = sadd.s32 %s91, 1
      %s93 = scalar_select %p90, %s91, %s92
      %p96 = pneg %p90
      %p97 = scmp.eq.s32.totalorder %s25, 2
      %p98 = por %p96, %p97
      %p99 = scmp.ne.s32.totalorder %s91, %s94
      %p100 = scmp.eq.s32.totalorder %s25, 0
      %p101 = por %p99, %p100
      %p102 = scmp.ne.s32.totalorder %s91, %s94
      %p103 = scmp.eq.s32.totalorder %s30, 2
      %p104 = por %p102, %p103
      %p105 = scmp.ne.s32.totalorder %s94, %s95
      %p106 = scmp.eq.s32.totalorder %s30, 0
      %p107 = por %p105, %p106
      %p108 = scmp.ne.s32.totalorder %s94, %s95
      %p109 = scmp.eq.s32.totalorder %s31, 2
      %p110 = por %p108, %p109
      %p112 = scmp.ne.s32.totalorder %s95, %s111
      %p113 = scmp.eq.s32.totalorder %s31, 0
      %p114 = por %p112, %p113
      %s115 = sld [smem:[#allocation3 + %s25]]
      %s116 = sld [smem:[#allocation3 + %s32]]
      %s117 = ssub.s32 %s115, %s116
      %p118 = scmp.eq.s32.totalorder %s117, 0
      %s120 = sadd.s32 %s119, 1
      %s121 = scalar_select %p118, %s119, %s120
      %p124 = pneg %p118
      %p125 = scmp.eq.s32.totalorder %s25, 2
      %p126 = por %p124, %p125
      %p127 = scmp.ne.s32.totalorder %s119, %s122
      %p128 = scmp.eq.s32.totalorder %s25, 0
      %p129 = por %p127, %p128
      %p130 = scmp.ne.s32.totalorder %s119, %s122
      %p131 = scmp.eq.s32.totalorder %s30, 2
      %p132 = por %p130, %p131
      %p133 = scmp.ne.s32.totalorder %s122, %s123
      %p134 = scmp.eq.s32.totalorder %s30, 0
      %p135 = por %p133, %p134
      %p136 = scmp.ne.s32.totalorder %s122, %s123
      %p137 = scmp.eq.s32.totalorder %s31, 2
      %p138 = por %p136, %p137
      %p140 = scmp.ne.s32.totalorder %s123, %s139
      %p141 = scmp.eq.s32.totalorder %s31, 0
      %p142 = por %p140, %p141
      %s143 = sld [smem:[#allocation3 + %s25]]
      %s144 = sld [smem:[#allocation3 + %s32]]
      %s145 = ssub.s32 %s143, %s144
      %p146 = scmp.eq.s32.totalorder %s145, 0
      %s148 = sadd.s32 %s147, 1
      %s149 = scalar_select %p146, %s147, %s148
      %p152 = pneg %p146
      %p153 = scmp.eq.s32.totalorder %s25, 2
      %p154 = por %p152, %p153
      %p155 = scmp.ne.s32.totalorder %s147, %s150
      %p156 = scmp.eq.s32.totalorder %s25, 0
      %p157 = por %p155, %p156
      %p158 = scmp.ne.s32.totalorder %s147, %s150
      %p159 = scmp.eq.s32.totalorder %s30, 2
      %p160 = por %p158, %p159
      %p161 = scmp.ne.s32.totalorder %s150, %s151
      %p162 = scmp.eq.s32.totalorder %s30, 0
      %p163 = por %p161, %p162
      %p164 = scmp.ne.s32.totalorder %s150, %s151
      %p165 = scmp.eq.s32.totalorder %s31, 2
      %p166 = por %p164, %p165
      %p168 = scmp.ne.s32.totalorder %s151, %s167
      %p169 = scmp.eq.s32.totalorder %s31, 0
      %p170 = por %p168, %p169
      %s171 = ssub.s32 %s25, %s32
      %p172 = scmp.eq.s32.totalorder %s171, 0
      %s174 = sadd.s32 %s173, 1
      %s175 = scalar_select %p172, %s173, %s174
      %p178 = pneg %p172
      %p179 = scmp.eq.s32.totalorder %s25, 2
      %p180 = por %p178, %p179
      %p181 = scmp.ne.s32.totalorder %s173, %s176
      %p182 = scmp.eq.s32.totalorder %s25, 0
      %p183 = por %p181, %p182
      %p184 = scmp.ne.s32.totalorder %s173, %s176
      %p185 = scmp.eq.s32.totalorder %s30, 2
      %p186 = por %p184, %p185
      %p187 = scmp.ne.s32.totalorder %s176, %s177
      %p188 = scmp.eq.s32.totalorder %s30, 0
      %p189 = por %p187, %p188
      %p190 = scmp.ne.s32.totalorder %s176, %s177
      %p191 = scmp.eq.s32.totalorder %s31, 2
      %p192 = por %p190, %p191
      %p194 = scmp.ne.s32.totalorder %s177, %s193
      %p195 = scmp.eq.s32.totalorder %s31, 0
      %p196 = por %p194, %p195
      %p197 = scmp.le.s32.totalorder 1, %s25
      %p198 = scmp.lt.s32.totalorder %s25, 4
      %p199 = pnand %p197, %p198
      %p200 = pneg %p199
      // Predicated region
      $region9: #{tpu_custom_call.1} parent=5 // pred_check
        _
      $region10: #{tpu_custom_call.1} parent=5 // pred_check_branch
        %202 = sbr.rel (%p199) target = $region12
      $region11: #{tpu_custom_call.1} parent=5 // pred_region
        %s203 = ssub.s32 %s25, 1
      $region12: #{tpu_custom_call.1} parent=5 // pred_fallthru
        _
      %p204 = scmp.lt.s32.totalorder %s25, 3
      // Predicated region
      $region13: #{tpu_custom_call.1} parent=5 // pred_check
        %p205 = pneg %p204
      $region14: #{tpu_custom_call.1} parent=5 // pred_check_branch
        %207 = sbr.rel (%p205) target = $region16
      $region15: #{tpu_custom_call.1} parent=5 // pred_region
        // Predicated region
        $region17: #{tpu_custom_call.1} parent=15 // pred_check
          %p208 = pneg %p45
        $region18: #{tpu_custom_call.1} parent=15 // pred_check_branch
          %210 = sbr.rel (%p208) target = $region20
        $region19: #{tpu_custom_call.1} parent=15 // pred_region
          %s211 = sand.u32 %s35, 1
          %s212 = scalar_lea.sflag [#allocation5], %s211
          %s213 = sand.u32 %s35, 1
          %s214 = smul.addr %s213, 256
          %s215 = scalar_lea.vmem [#allocation4], %s214
          %s216 = smul.u32 32, %s25
          %s218 = ssub.s32 4096, 4096
          %219 = vsyncadd %s212, %s218
          %s220 = smul.addr %s216, 128
          %s221 = scalar_lea.hbm %s1, %s220
          %s222 = sshll.u32 %s215, 4
          %s223 = int_to_ptr.vmem [resolvable:$true] %s222
          %228 = dma.hbm_to_vmem [thread:$0]  %s221, 4096, %s223, %s212, 128, 128, 8
        $region20: #{tpu_custom_call.1} parent=15 // pred_fallthru
          _
        // Predicated region
        $region21: #{tpu_custom_call.1} parent=15 // pred_check
          %p229 = pneg %p73
        $region22: #{tpu_custom_call.1} parent=15 // pred_check_branch
          %231 = sbr.rel (%p229) target = $region24
        $region23: #{tpu_custom_call.1} parent=15 // pred_region
          %s232 = sand.u32 %s25, 1
          %s233 = scalar_lea.sflag [#allocation8], %s232
          %s234 = sand.u32 %s63, 1
          %s235 = smul.addr %s234, 128
          %s236 = scalar_lea.vmem [#allocation7], %s235
          %s237 = sld [smem:[#allocation3 + %s25]]
          %s239 = ssub.s32 2048, 2048
          %240 = vsyncadd %s233, %s239
          %s241 = smul.addr %s237, 16
          %s242 = smul.addr %s241, 128
          %s243 = scalar_lea.hbm %s2, %s242
          %s244 = sshll.u32 %s236, 4
          %s245 = int_to_ptr.vmem [resolvable:$true] %s244
          %250 = dma.hbm_to_vmem [thread:$0]  %s243, 2048, %s245, %s233, 128, 128, 8
        $region24: #{tpu_custom_call.1} parent=15 // pred_fallthru
          _
        // Predicated region
        $region25: #{tpu_custom_call.1} parent=15 // pred_check
          %p251 = pneg %p101
        $region26: #{tpu_custom_call.1} parent=15 // pred_check_branch
          %253 = sbr.rel (%p251) target = $region28
        $region27: #{tpu_custom_call.1} parent=15 // pred_region
          %s254 = sld [smem:[#allocation3 + %s25]]
          %p255 = scmp.lt.s32.totalorder %s254, 2
          %s256 = scalar_select %p255, %s254, 2
          %s257 = scalar_lea.vmem %s3, %s256
          %s258 = sld [smem:[#allocation3 + %s25]]
        $region28: #{tpu_custom_call.1} parent=15 // pred_fallthru
          _
        // Predicated region
        $region29: #{tpu_custom_call.1} parent=15 // pred_check
          %p259 = pneg %p129
        $region30: #{tpu_custom_call.1} parent=15 // pred_check_branch
          %261 = sbr.rel (%p259) target = $region32
        $region31: #{tpu_custom_call.1} parent=15 // pred_region
          %s262 = sand.u32 %s25, 1
          %s263 = scalar_lea.sflag [#allocation8], %s262
          %s264 = sand.u32 %s119, 1
          %s265 = smul.addr %s264, 128
          %s266 = scalar_lea.vmem [#allocation9], %s265
          %s267 = sld [smem:[#allocation3 + %s25]]
          %s269 = ssub.s32 2048, 2048
          %270 = vsyncadd %s263, %s269
          %s271 = smul.addr %s267, 16
          %s272 = smul.addr %s271, 128
          %s273 = scalar_lea.hbm %s4, %s272
          %s274 = sshll.u32 %s266, 4
          %s275 = int_to_ptr.vmem [resolvable:$true] %s274
          %280 = dma.hbm_to_vmem [thread:$0]  %s273, 2048, %s275, %s263, 128, 128, 8
        $region32: #{tpu_custom_call.1} parent=15 // pred_fallthru
          _
        // Predicated region
        $region33: #{tpu_custom_call.1} parent=15 // pred_check
          %p281 = pneg %p157
        $region34: #{tpu_custom_call.1} parent=15 // pred_check_branch
          %283 = sbr.rel (%p281) target = $region36
        $region35: #{tpu_custom_call.1} parent=15 // pred_region
          %s284 = sld [smem:[#allocation3 + %s25]]
          %p285 = scmp.lt.s32.totalorder %s284, 2
          %s286 = scalar_select %p285, %s284, 2
          %s287 = scalar_lea.vmem %s5, %s286
          %s288 = sld [smem:[#allocation3 + %s25]]
        $region36: #{tpu_custom_call.1} parent=15 // pred_fallthru
          _
      $region16: #{tpu_custom_call.1} parent=5 // pred_fallthru
        _
      %p289 = scmp.le.s32.totalorder 1, %s25
      %p290 = scmp.lt.s32.totalorder %s25, 4
      %p291 = pnand %p289, %p290
      %p292 = pneg %p291
      // Predicated region
      $region37: #{tpu_custom_call.1} parent=5 // pred_check
        _
      $region38: #{tpu_custom_call.1} parent=5 // pred_check_branch
        %294 = sbr.rel (%p291) target = $region40
      $region39: #{tpu_custom_call.1} parent=5 // pred_region
        %s295 = ssub.s32 %s25, 1
        %s296 = sand.u32 %s38, 1
        %s297 = scalar_lea.sflag [#allocation5], %s296
        %s298 = sand.u32 %s38, 1
        %s299 = smul.addr %s298, 256
        %s300 = scalar_lea.vmem [#allocation4], %s299
        // Predicated region
        $region41: #{tpu_custom_call.1} parent=39 // pred_check
          %p301 = pneg %p51
        $region42: #{tpu_custom_call.1} parent=39 // pred_check_branch
          %303 = sbr.rel (%p301) target = $region44
        $region43: #{tpu_custom_call.1} parent=39 // pred_region
          %304 = dma.done %s297, 4096
        $region44: #{tpu_custom_call.1} parent=39 // pred_fallthru
          _
        %s305 = sand.u32 %s30, 1
        %s306 = scalar_lea.sflag [#allocation8], %s305
        %s307 = sand.u32 %s66, 1
        %s308 = smul.addr %s307, 128
        %s309 = scalar_lea.vmem [#allocation7], %s308
        // Predicated region
        $region45: #{tpu_custom_call.1} parent=39 // pred_check
          %p310 = pneg %p79
        $region46: #{tpu_custom_call.1} parent=39 // pred_check_branch
          %312 = sbr.rel (%p310) target = $region48
        $region47: #{tpu_custom_call.1} parent=39 // pred_region
          %313 = dma.done %s306, 2048
        $region48: #{tpu_custom_call.1} parent=39 // pred_fallthru
          _
        %s314 = sand.u32 %s30, 1
        %s315 = scalar_lea.sflag [#allocation8], %s314
        %s316 = sand.u32 %s122, 1
        %s317 = smul.addr %s316, 128
        %s318 = scalar_lea.vmem [#allocation9], %s317
        // Predicated region
        $region49: #{tpu_custom_call.1} parent=39 // pred_check
          %p319 = pneg %p135
        $region50: #{tpu_custom_call.1} parent=39 // pred_check_branch
          %321 = sbr.rel (%p319) target = $region52
        $region51: #{tpu_custom_call.1} parent=39 // pred_region
          %322 = dma.done %s315, 2048
        $region52: #{tpu_custom_call.1} parent=39 // pred_fallthru
          _
        %s323 = sand.u32 %s38, 1
        %s324 = scalar_lea.sflag [#allocation5], %s323
        %s325 = sand.u32 %s38, 1
        %s326 = smul.addr %s325, 256
        %s327 = scalar_lea.vmem [#allocation4], %s326
        %p328 = pneg %p51
        %p329 = pneg %p48
        %s330 = sand.u32 %s30, 1
        %s331 = scalar_lea.sflag [#allocation8], %s330
        %s332 = sand.u32 %s66, 1
        %s333 = smul.addr %s332, 128
        %s334 = scalar_lea.vmem [#allocation7], %s333
        %p335 = pneg %p79
        %p336 = pneg %p76
        %s337 = sld [smem:[#allocation3 + %s30]]
        %p338 = scmp.lt.s32.totalorder %s337, 2
        %s339 = scalar_select %p338, %s337, 2
        %s340 = scalar_lea.vmem %s3, %s339
        %p341 = pneg %p107
        %p342 = pneg %p104
        %s343 = sand.u32 %s30, 1
        %s344 = scalar_lea.sflag [#allocation8], %s343
        %s345 = sand.u32 %s122, 1
        %s346 = smul.addr %s345, 128
        %s347 = scalar_lea.vmem [#allocation9], %s346
        %p348 = pneg %p135
        %p349 = pneg %p132
        %s350 = sld [smem:[#allocation3 + %s30]]
        %p351 = scmp.lt.s32.totalorder %s350, 2
        %s352 = scalar_select %p351, %s350, 2
        %s353 = scalar_lea.vmem %s5, %s352
        %p354 = pneg %p163
        %p355 = pneg %p160
        %p356 = pneg %p189
        %p357 = pneg %p186
        %s358 = sand.u32 %s176, 1
        %s359 = scalar_lea.sflag [#allocation6], %s358
        %s360 = sand.u32 %s176, 1
        %s361 = smul.addr %s360, 256
        %s362 = scalar_lea.vmem [#allocation10], %s361
        %s363 = smul.u32 32, %s30
        %s364 = sld [smem:[#allocation3 + %s30]]
        %s365 = sld [smem:[#allocation3 + %s30]]
        %p366 = scmp.lt.s32.totalorder %s365, 2
        %s367 = scalar_select %p366, %s365, 2
        %s368 = scalar_lea.vmem %s3, %s367
        %s369 = sld [smem:[#allocation3 + %s30]]
        %s370 = sld [smem:[#allocation3 + %s30]]
        %s371 = sld [smem:[#allocation3 + %s30]]
        %p372 = scmp.lt.s32.totalorder %s371, 2
        %s373 = scalar_select %p372, %s371, 2
        %s374 = scalar_lea.vmem %s5, %s373
        %s375 = sld [smem:[#allocation3 + %s30]]
        %s376 = smul.u32 32, %s30
        %v377 = vld [vmem:[%s300] sm:$0xff]
        %v378 = vld [vmem:[%s300 + $0x8] sm:$0xff]
        %v379 = vld [vmem:[%s300 + $0x10] sm:$0xff]
        %v380 = vld [vmem:[%s300 + $0x18] sm:$0xff]
        %v381 = vld [vmem:[%s300 + $0x20] sm:$0xff]
        %v382 = vld [vmem:[%s300 + $0x28] sm:$0xff]
        %v383 = vld [vmem:[%s300 + $0x30] sm:$0xff]
        %v384 = vld [vmem:[%s300 + $0x38] sm:$0xff]
        %v385 = vld [vmem:[%s300 + $0x40] sm:$0xff]
        %v386 = vld [vmem:[%s300 + $0x48] sm:$0xff]
        %v387 = vld [vmem:[%s300 + $0x50] sm:$0xff]
        %v388 = vld [vmem:[%s300 + $0x58] sm:$0xff]
        %v389 = vld [vmem:[%s300 + $0x60] sm:$0xff]
        %v390 = vld [vmem:[%s300 + $0x68] sm:$0xff]
        %v391 = vld [vmem:[%s300 + $0x70] sm:$0xff]
        %v392 = vld [vmem:[%s300 + $0x78] sm:$0xff]
        %v393 = vld [vmem:[%s300 + $0x80] sm:$0xff]
        %v394 = vld [vmem:[%s300 + $0x88] sm:$0xff]
        %v395 = vld [vmem:[%s300 + $0x90] sm:$0xff]
        %v396 = vld [vmem:[%s300 + $0x98] sm:$0xff]
        %v397 = vld [vmem:[%s300 + $0xa0] sm:$0xff]
        %v398 = vld [vmem:[%s300 + $0xa8] sm:$0xff]
        %v399 = vld [vmem:[%s300 + $0xb0] sm:$0xff]
        %v400 = vld [vmem:[%s300 + $0xb8] sm:$0xff]
        %v401 = vld [vmem:[%s300 + $0xc0] sm:$0xff]
        %v402 = vld [vmem:[%s300 + $0xc8] sm:$0xff]
        %v403 = vld [vmem:[%s300 + $0xd0] sm:$0xff]
        %v404 = vld [vmem:[%s300 + $0xd8] sm:$0xff]
        %v405 = vld [vmem:[%s300 + $0xe0] sm:$0xff]
        %v406 = vld [vmem:[%s300 + $0xe8] sm:$0xff]
        %v407 = vld [vmem:[%s300 + $0xf0] sm:$0xff]
        %v408 = vld [vmem:[%s300 + $0xf8] sm:$0xff]
        %v409 = vld [vmem:[%s309] sm:$0xff]
        %v410 = vld [vmem:[%s309 + $0x8] sm:$0xff]
        %v411 = vld [vmem:[%s309 + $0x10] sm:$0xff]
        %v412 = vld [vmem:[%s309 + $0x18] sm:$0xff]
        %v413 = vld [vmem:[%s309 + $0x20] sm:$0xff]
        %v414 = vld [vmem:[%s309 + $0x28] sm:$0xff]
        %v415 = vld [vmem:[%s309 + $0x30] sm:$0xff]
        %v416 = vld [vmem:[%s309 + $0x38] sm:$0xff]
        %v417 = vld [vmem:[%s309 + $0x40] sm:$0xff]
        %v418 = vld [vmem:[%s309 + $0x48] sm:$0xff]
        %v419 = vld [vmem:[%s309 + $0x50] sm:$0xff]
        %v420 = vld [vmem:[%s309 + $0x58] sm:$0xff]
        %v421 = vld [vmem:[%s309 + $0x60] sm:$0xff]
        %v422 = vld [vmem:[%s309 + $0x68] sm:$0xff]
        %v423 = vld [vmem:[%s309 + $0x70] sm:$0xff]
        %v424 = vld [vmem:[%s309 + $0x78] sm:$0xff]
        %v425 = vld [vmem:[%s368] sm:$0x1]
        %v426 = vld [vmem:[%s318] sm:$0xff]
        %v427 = vld [vmem:[%s318 + $0x8] sm:$0xff]
        %v428 = vld [vmem:[%s318 + $0x10] sm:$0xff]
        %v429 = vld [vmem:[%s318 + $0x18] sm:$0xff]
        %v430 = vld [vmem:[%s318 + $0x20] sm:$0xff]
        %v431 = vld [vmem:[%s318 + $0x28] sm:$0xff]
        %v432 = vld [vmem:[%s318 + $0x30] sm:$0xff]
        %v433 = vld [vmem:[%s318 + $0x38] sm:$0xff]
        %v434 = vld [vmem:[%s318 + $0x40] sm:$0xff]
        %v435 = vld [vmem:[%s318 + $0x48] sm:$0xff]
        %v436 = vld [vmem:[%s318 + $0x50] sm:$0xff]
        %v437 = vld [vmem:[%s318 + $0x58] sm:$0xff]
        %v438 = vld [vmem:[%s318 + $0x60] sm:$0xff]
        %v439 = vld [vmem:[%s318 + $0x68] sm:$0xff]
        %v440 = vld [vmem:[%s318 + $0x70] sm:$0xff]
        %v441 = vld [vmem:[%s318 + $0x78] sm:$0xff]
        %v442 = vld [vmem:[%s374] sm:$0x1]
        %v444 = vlaneseq
        %v445 = vshrl.u32 %v444, 7
        %v446 = vsub.s32 0, %v445
        %v447 = vrot.slane %v425, %v446
        %449 = vmatprep.subr.mxu0 0.0
        %450 = vmatpush1.msra.mxu0 %v424
        %451 = vmatprep.subr.mxu0 0.0
        %452 = vmatpush1.msra.mxu0 %v423
        %453 = vmatprep.subr.mxu0 0.0
        %454 = vmatpush1.msra.mxu0 %v422
        %455 = vmatprep.subr.mxu0 0.0
        %456 = vmatpush1.msra.mxu0 %v421
        %457 = vmatprep.subr.mxu0 0.0
        %458 = vmatpush1.msra.mxu0 %v420
        %459 = vmatprep.subr.mxu0 0.0
        %460 = vmatpush1.msra.mxu0 %v419
        %461 = vmatprep.subr.mxu0 0.0
        %462 = vmatpush1.msra.mxu0 %v418
        %463 = vmatprep.subr.mxu0 0.0
        %464 = vmatpush1.msra.mxu0 %v417
        %465 = vmatprep.subr.mxu0 0.0
        %466 = vmatpush1.msra.mxu0 %v416
        %467 = vmatprep.subr.mxu0 0.0
        %468 = vmatpush1.msra.mxu0 %v415
        %469 = vmatprep.subr.mxu0 0.0
        %470 = vmatpush1.msra.mxu0 %v414
        %471 = vmatprep.subr.mxu0 0.0
        %472 = vmatpush1.msra.mxu0 %v413
        %473 = vmatprep.subr.mxu0 0.0
        %474 = vmatpush1.msra.mxu0 %v412
        %475 = vmatprep.subr.mxu0 0.0
        %476 = vmatpush1.msra.mxu0 %v411
        %477 = vmatprep.subr.mxu0 0.0
        %478 = vmatpush1.msra.mxu0 %v410
        %479 = vmatprep.subr.mxu0 0.0
        %480 = vmatpush1.msra.mxu0 %v409
        %481 = vmatprep.subr.mxu0 0.0
        %482 = vmatpush2.msra.mxu0 0.0
        %483 = vmatprep.subr.mxu0 0.0
        %484 = vmatpush2.msra.mxu0 0.0
        %485 = vmatprep.subr.mxu0 0.0
        %486 = vmatpush2.msra.mxu0 0.0
        %487 = vmatprep.subr.mxu0 0.0
        %488 = vmatpush2.msra.mxu0 0.0
        %489 = vmatprep.subr.mxu0 0.0
        %490 = vmatpush2.msra.mxu0 0.0
        %491 = vmatprep.subr.mxu0 0.0
        %492 = vmatpush2.msra.mxu0 0.0
        %493 = vmatprep.subr.mxu0 0.0
        %494 = vmatpush2.msra.mxu0 0.0
        %495 = vmatprep.subr.mxu0 0.0
        %496 = vmatpush2.msra.mxu0 0.0
        %497 = vmatprep.subr.mxu0 0.0
        %498 = vmatpush2.msra.mxu0 0.0
        %499 = vmatprep.subr.mxu0 0.0
        %500 = vmatpush2.msra.mxu0 0.0
        %501 = vmatprep.subr.mxu0 0.0
        %502 = vmatpush2.msra.mxu0 0.0
        %503 = vmatprep.subr.mxu0 0.0
        %504 = vmatpush2.msra.mxu0 0.0
        %505 = vmatprep.subr.mxu0 0.0
        %506 = vmatpush2.msra.mxu0 0.0
        %507 = vmatprep.subr.mxu0 0.0
        %508 = vmatpush2.msra.mxu0 0.0
        %509 = vmatprep.subr.mxu0 0.0
        %510 = vmatpush2.msra.mxu0 0.0
        %511 = vmatprep.subr.mxu0 0.0
        %512 = vmatpush2.msra.mxu0 0.0
        %513 = vmatprep.mubr.f32.mxu0 0.0
        %514 = vmatmul.mubr.f32.gmra.mxu0 %v377
        %v515 = vpop.f32.mrf.mxu0
        %v516 = vadd.f32 %v447, %v515
        %v517 = vpop.f32.mrf.mxu0
        %518 = vmatprep.mubr.f32.mxu0 0.0
        %519 = vmatmul.mubr.f32.gmra.mxu0 %v378
        %v520 = vpop.f32.mrf.mxu0
        %v521 = vadd.f32 %v447, %v520
        %v522 = vpop.f32.mrf.mxu0
        %523 = vmatprep.mubr.f32.mxu0 0.0
        %524 = vmatmul.mubr.f32.gmra.mxu0 %v379
        %v525 = vpop.f32.mrf.mxu0
        %v526 = vadd.f32 %v447, %v525
        %v527 = vpop.f32.mrf.mxu0
        %528 = vmatprep.mubr.f32.mxu0 0.0
        %529 = vmatmul.mubr.f32.gmra.mxu0 %v380
        %v530 = vpop.f32.mrf.mxu0
        %v531 = vadd.f32 %v447, %v530
        %v532 = vpop.f32.mrf.mxu0
        %533 = vmatprep.mubr.f32.mxu0 0.0
        %534 = vmatmul.mubr.f32.gmra.mxu0 %v381
        %v535 = vpop.f32.mrf.mxu0
        %v536 = vadd.f32 %v447, %v535
        %v537 = vpop.f32.mrf.mxu0
        %538 = vmatprep.mubr.f32.mxu0 0.0
        %539 = vmatmul.mubr.f32.gmra.mxu0 %v382
        %v540 = vpop.f32.mrf.mxu0
        %v541 = vadd.f32 %v447, %v540
        %v542 = vpop.f32.mrf.mxu0
        %543 = vmatprep.mubr.f32.mxu0 0.0
        %544 = vmatmul.mubr.f32.gmra.mxu0 %v383
        %v545 = vpop.f32.mrf.mxu0
        %v546 = vadd.f32 %v447, %v545
        %v547 = vpop.f32.mrf.mxu0
        %548 = vmatprep.mubr.f32.mxu0 0.0
        %549 = vmatmul.mubr.f32.gmra.mxu0 %v384
        %v550 = vpop.f32.mrf.mxu0
        %v551 = vadd.f32 %v447, %v550
        %v552 = vpop.f32.mrf.mxu0
        %553 = vmatprep.mubr.f32.mxu0 0.0
        %554 = vmatmul.mubr.f32.gmra.mxu0 %v385
        %v555 = vpop.f32.mrf.mxu0
        %v556 = vadd.f32 %v447, %v555
        %v557 = vpop.f32.mrf.mxu0
        %558 = vmatprep.mubr.f32.mxu0 0.0
        %559 = vmatmul.mubr.f32.gmra.mxu0 %v386
        %v560 = vpop.f32.mrf.mxu0
        %v561 = vadd.f32 %v447, %v560
        %v562 = vpop.f32.mrf.mxu0
        %563 = vmatprep.mubr.f32.mxu0 0.0
        %564 = vmatmul.mubr.f32.gmra.mxu0 %v387
        %v565 = vpop.f32.mrf.mxu0
        %v566 = vadd.f32 %v447, %v565
        %v567 = vpop.f32.mrf.mxu0
        %568 = vmatprep.mubr.f32.mxu0 0.0
        %569 = vmatmul.mubr.f32.gmra.mxu0 %v388
        %v570 = vpop.f32.mrf.mxu0
        %v571 = vadd.f32 %v447, %v570
        %v572 = vpop.f32.mrf.mxu0
        %573 = vmatprep.mubr.f32.mxu0 0.0
        %574 = vmatmul.mubr.f32.gmra.mxu0 %v389
        %v575 = vpop.f32.mrf.mxu0
        %v576 = vadd.f32 %v447, %v575
        %v577 = vpop.f32.mrf.mxu0
        %578 = vmatprep.mubr.f32.mxu0 0.0
        %579 = vmatmul.mubr.f32.gmra.mxu0 %v390
        %v580 = vpop.f32.mrf.mxu0
        %v581 = vadd.f32 %v447, %v580
        %v582 = vpop.f32.mrf.mxu0
        %583 = vmatprep.mubr.f32.mxu0 0.0
        %584 = vmatmul.mubr.f32.gmra.mxu0 %v391
        %v585 = vpop.f32.mrf.mxu0
        %v586 = vadd.f32 %v447, %v585
        %v587 = vpop.f32.mrf.mxu0
        %588 = vmatprep.mubr.f32.mxu0 0.0
        %589 = vmatmul.mubr.f32.gmra.mxu0 %v392
        %v590 = vpop.f32.mrf.mxu0
        %v591 = vadd.f32 %v447, %v590
        %v592 = vpop.f32.mrf.mxu0
        %593 = vmatprep.mubr.f32.mxu0 0.0
        %594 = vmatmul.mubr.f32.gmra.mxu0 %v393
        %v595 = vpop.f32.mrf.mxu0
        %v596 = vadd.f32 %v447, %v595
        %v597 = vpop.f32.mrf.mxu0
        %598 = vmatprep.mubr.f32.mxu0 0.0
        %599 = vmatmul.mubr.f32.gmra.mxu0 %v394
        %v600 = vpop.f32.mrf.mxu0
        %v601 = vadd.f32 %v447, %v600
        %v602 = vpop.f32.mrf.mxu0
        %603 = vmatprep.mubr.f32.mxu0 0.0
        %604 = vmatmul.mubr.f32.gmra.mxu0 %v395
        %v605 = vpop.f32.mrf.mxu0
        %v606 = vadd.f32 %v447, %v605
        %v607 = vpop.f32.mrf.mxu0
        %608 = vmatprep.mubr.f32.mxu0 0.0
        %609 = vmatmul.mubr.f32.gmra.mxu0 %v396
        %v610 = vpop.f32.mrf.mxu0
        %v611 = vadd.f32 %v447, %v610
        %v612 = vpop.f32.mrf.mxu0
        %613 = vmatprep.mubr.f32.mxu0 0.0
        %614 = vmatmul.mubr.f32.gmra.mxu0 %v397
        %v615 = vpop.f32.mrf.mxu0
        %v616 = vadd.f32 %v447, %v615
        %v617 = vpop.f32.mrf.mxu0
        %618 = vmatprep.mubr.f32.mxu0 0.0
        %619 = vmatmul.mubr.f32.gmra.mxu0 %v398
        %v620 = vpop.f32.mrf.mxu0
        %v621 = vadd.f32 %v447, %v620
        %v622 = vpop.f32.mrf.mxu0
        %623 = vmatprep.mubr.f32.mxu0 0.0
        %624 = vmatmul.mubr.f32.gmra.mxu0 %v399
        %v625 = vpop.f32.mrf.mxu0
        %v626 = vadd.f32 %v447, %v625
        %v627 = vpop.f32.mrf.mxu0
        %628 = vmatprep.mubr.f32.mxu0 0.0
        %629 = vmatmul.mubr.f32.gmra.mxu0 %v400
        %v630 = vpop.f32.mrf.mxu0
        %v631 = vadd.f32 %v447, %v630
        %v632 = vpop.f32.mrf.mxu0
        %633 = vmatprep.mubr.f32.mxu0 0.0
        %634 = vmatmul.mubr.f32.gmra.mxu0 %v401
        %v635 = vpop.f32.mrf.mxu0
        %v636 = vadd.f32 %v447, %v635
        %v637 = vpop.f32.mrf.mxu0
        %638 = vmatprep.mubr.f32.mxu0 0.0
        %639 = vmatmul.mubr.f32.gmra.mxu0 %v402
        %v640 = vpop.f32.mrf.mxu0
        %v641 = vadd.f32 %v447, %v640
        %v642 = vpop.f32.mrf.mxu0
        %643 = vmatprep.mubr.f32.mxu0 0.0
        %644 = vmatmul.mubr.f32.gmra.mxu0 %v403
        %v645 = vpop.f32.mrf.mxu0
        %v646 = vadd.f32 %v447, %v645
        %v647 = vpop.f32.mrf.mxu0
        %648 = vmatprep.mubr.f32.mxu0 0.0
        %649 = vmatmul.mubr.f32.gmra.mxu0 %v404
        %v650 = vpop.f32.mrf.mxu0
        %v651 = vadd.f32 %v447, %v650
        %v652 = vpop.f32.mrf.mxu0
        %653 = vmatprep.mubr.f32.mxu0 0.0
        %654 = vmatmul.mubr.f32.gmra.mxu0 %v405
        %v655 = vpop.f32.mrf.mxu0
        %v656 = vadd.f32 %v447, %v655
        %v657 = vpop.f32.mrf.mxu0
        %658 = vmatprep.mubr.f32.mxu0 0.0
        %659 = vmatmul.mubr.f32.gmra.mxu0 %v406
        %v660 = vpop.f32.mrf.mxu0
        %v661 = vadd.f32 %v447, %v660
        %v662 = vpop.f32.mrf.mxu0
        %663 = vmatprep.mubr.f32.mxu0 0.0
        %664 = vmatmul.mubr.f32.gmra.mxu0 %v407
        %v665 = vpop.f32.mrf.mxu0
        %v666 = vadd.f32 %v447, %v665
        %v667 = vpop.f32.mrf.mxu0
        %668 = vmatprep.mubr.f32.mxu0 0.0
        %669 = vmatmul.mubr.f32.gmra.mxu0 %v408
        %v670 = vpop.f32.mrf.mxu0
        %v671 = vadd.f32 %v447, %v670
        %v672 = vpop.f32.mrf.mxu0
        %673 = vdwg.mxu0
        %v674 = vmax.f32 %v516, 0.0
        %v675 = vmax.f32 %v521, 0.0
        %v676 = vmax.f32 %v526, 0.0
        %v677 = vmax.f32 %v531, 0.0
        %v678 = vmax.f32 %v536, 0.0
        %v679 = vmax.f32 %v541, 0.0
        %v680 = vmax.f32 %v546, 0.0
        %v681 = vmax.f32 %v551, 0.0
        %v682 = vmax.f32 %v556, 0.0
        %v683 = vmax.f32 %v561, 0.0
        %v684 = vmax.f32 %v566, 0.0
        %v685 = vmax.f32 %v571, 0.0
        %v686 = vmax.f32 %v576, 0.0
        %v687 = vmax.f32 %v581, 0.0
        %v688 = vmax.f32 %v586, 0.0
        %v689 = vmax.f32 %v591, 0.0
        %v690 = vmax.f32 %v596, 0.0
        %v691 = vmax.f32 %v601, 0.0
        %v692 = vmax.f32 %v606, 0.0
        %v693 = vmax.f32 %v611, 0.0
        %v694 = vmax.f32 %v616, 0.0
        %v695 = vmax.f32 %v621, 0.0
        %v696 = vmax.f32 %v626, 0.0
        %v697 = vmax.f32 %v631, 0.0
        %v698 = vmax.f32 %v636, 0.0
        %v699 = vmax.f32 %v641, 0.0
        %v700 = vmax.f32 %v646, 0.0
        %v701 = vmax.f32 %v651, 0.0
        %v702 = vmax.f32 %v656, 0.0
        %v703 = vmax.f32 %v661, 0.0
        %v704 = vmax.f32 %v666, 0.0
        %v705 = vmax.f32 %v671, 0.0
        %v707 = vlaneseq
        %v708 = vshrl.u32 %v707, 7
        %v709 = vsub.s32 0, %v708
        %v710 = vrot.slane %v442, %v709
        %712 = vmatprep.subr.mxu0 0.0
        %713 = vmatpush1.msra.mxu0 %v441
        %714 = vmatprep.subr.mxu0 0.0
        %715 = vmatpush1.msra.mxu0 %v440
        %716 = vmatprep.subr.mxu0 0.0
        %717 = vmatpush1.msra.mxu0 %v439
        %718 = vmatprep.subr.mxu0 0.0
        %719 = vmatpush1.msra.mxu0 %v438
        %720 = vmatprep.subr.mxu0 0.0
        %721 = vmatpush1.msra.mxu0 %v437
        %722 = vmatprep.subr.mxu0 0.0
        %723 = vmatpush1.msra.mxu0 %v436
        %724 = vmatprep.subr.mxu0 0.0
        %725 = vmatpush1.msra.mxu0 %v435
        %726 = vmatprep.subr.mxu0 0.0
        %727 = vmatpush1.msra.mxu0 %v434
        %728 = vmatprep.subr.mxu0 0.0
        %729 = vmatpush1.msra.mxu0 %v433
        %730 = vmatprep.subr.mxu0 0.0
        %731 = vmatpush1.msra.mxu0 %v432
        %732 = vmatprep.subr.mxu0 0.0
        %733 = vmatpush1.msra.mxu0 %v431
        %734 = vmatprep.subr.mxu0 0.0
        %735 = vmatpush1.msra.mxu0 %v430
        %736 = vmatprep.subr.mxu0 0.0
        %737 = vmatpush1.msra.mxu0 %v429
        %738 = vmatprep.subr.mxu0 0.0
        %739 = vmatpush1.msra.mxu0 %v428
        %740 = vmatprep.subr.mxu0 0.0
        %741 = vmatpush1.msra.mxu0 %v427
        %742 = vmatprep.subr.mxu0 0.0
        %743 = vmatpush1.msra.mxu0 %v426
        %744 = vmatprep.subr.mxu0 0.0
        %745 = vmatpush2.msra.mxu0 0.0
        %746 = vmatprep.subr.mxu0 0.0
        %747 = vmatpush2.msra.mxu0 0.0
        %748 = vmatprep.subr.mxu0 0.0
        %749 = vmatpush2.msra.mxu0 0.0
        %750 = vmatprep.subr.mxu0 0.0
        %751 = vmatpush2.msra.mxu0 0.0
        %752 = vmatprep.subr.mxu0 0.0
        %753 = vmatpush2.msra.mxu0 0.0
        %754 = vmatprep.subr.mxu0 0.0
        %755 = vmatpush2.msra.mxu0 0.0
        %756 = vmatprep.subr.mxu0 0.0
        %757 = vmatpush2.msra.mxu0 0.0
        %758 = vmatprep.subr.mxu0 0.0
        %759 = vmatpush2.msra.mxu0 0.0
        %760 = vmatprep.subr.mxu0 0.0
        %761 = vmatpush2.msra.mxu0 0.0
        %762 = vmatprep.subr.mxu0 0.0
        %763 = vmatpush2.msra.mxu0 0.0
        %764 = vmatprep.subr.mxu0 0.0
        %765 = vmatpush2.msra.mxu0 0.0
        %766 = vmatprep.subr.mxu0 0.0
        %767 = vmatpush2.msra.mxu0 0.0
        %768 = vmatprep.subr.mxu0 0.0
        %769 = vmatpush2.msra.mxu0 0.0
        %770 = vmatprep.subr.mxu0 0.0
        %771 = vmatpush2.msra.mxu0 0.0
        %772 = vmatprep.subr.mxu0 0.0
        %773 = vmatpush2.msra.mxu0 0.0
        %774 = vmatprep.subr.mxu0 0.0
        %775 = vmatpush2.msra.mxu0 0.0
        %776 = vmatprep.mubr.f32.mxu0 0.0
        %777 = vmatmul.mubr.f32.gmra.mxu0 %v674
        %v778 = vpop.f32.mrf.mxu0
        %v779 = vadd.f32 %v710, %v778
        %v780 = vpop.f32.mrf.mxu0
        %781 = vmatprep.mubr.f32.mxu0 0.0
        %782 = vmatmul.mubr.f32.gmra.mxu0 %v675
        %v783 = vpop.f32.mrf.mxu0
        %v784 = vadd.f32 %v710, %v783
        %v785 = vpop.f32.mrf.mxu0
        %786 = vmatprep.mubr.f32.mxu0 0.0
        %787 = vmatmul.mubr.f32.gmra.mxu0 %v676
        %v788 = vpop.f32.mrf.mxu0
        %v789 = vadd.f32 %v710, %v788
        %v790 = vpop.f32.mrf.mxu0
        %791 = vmatprep.mubr.f32.mxu0 0.0
        %792 = vmatmul.mubr.f32.gmra.mxu0 %v677
        %v793 = vpop.f32.mrf.mxu0
        %v794 = vadd.f32 %v710, %v793
        %v795 = vpop.f32.mrf.mxu0
        %796 = vmatprep.mubr.f32.mxu0 0.0
        %797 = vmatmul.mubr.f32.gmra.mxu0 %v678
        %v798 = vpop.f32.mrf.mxu0
        %v799 = vadd.f32 %v710, %v798
        %v800 = vpop.f32.mrf.mxu0
        %801 = vmatprep.mubr.f32.mxu0 0.0
        %802 = vmatmul.mubr.f32.gmra.mxu0 %v679
        %v803 = vpop.f32.mrf.mxu0
        %v804 = vadd.f32 %v710, %v803
        %v805 = vpop.f32.mrf.mxu0
        %806 = vmatprep.mubr.f32.mxu0 0.0
        %807 = vmatmul.mubr.f32.gmra.mxu0 %v680
        %v808 = vpop.f32.mrf.mxu0
        %v809 = vadd.f32 %v710, %v808
        %v810 = vpop.f32.mrf.mxu0
        %811 = vmatprep.mubr.f32.mxu0 0.0
        %812 = vmatmul.mubr.f32.gmra.mxu0 %v681
        %v813 = vpop.f32.mrf.mxu0
        %v814 = vadd.f32 %v710, %v813
        %v815 = vpop.f32.mrf.mxu0
        %816 = vmatprep.mubr.f32.mxu0 0.0
        %817 = vmatmul.mubr.f32.gmra.mxu0 %v682
        %v818 = vpop.f32.mrf.mxu0
        %v819 = vadd.f32 %v710, %v818
        %v820 = vpop.f32.mrf.mxu0
        %821 = vmatprep.mubr.f32.mxu0 0.0
        %822 = vmatmul.mubr.f32.gmra.mxu0 %v683
        %v823 = vpop.f32.mrf.mxu0
        %v824 = vadd.f32 %v710, %v823
        %v825 = vpop.f32.mrf.mxu0
        %826 = vmatprep.mubr.f32.mxu0 0.0
        %827 = vmatmul.mubr.f32.gmra.mxu0 %v684
        %v828 = vpop.f32.mrf.mxu0
        %v829 = vadd.f32 %v710, %v828
        %v830 = vpop.f32.mrf.mxu0
        %831 = vmatprep.mubr.f32.mxu0 0.0
        %832 = vmatmul.mubr.f32.gmra.mxu0 %v685
        %v833 = vpop.f32.mrf.mxu0
        %v834 = vadd.f32 %v710, %v833
        %v835 = vpop.f32.mrf.mxu0
        %836 = vmatprep.mubr.f32.mxu0 0.0
        %837 = vmatmul.mubr.f32.gmra.mxu0 %v686
        %v838 = vpop.f32.mrf.mxu0
        %v839 = vadd.f32 %v710, %v838
        %v840 = vpop.f32.mrf.mxu0
        %841 = vmatprep.mubr.f32.mxu0 0.0
        %842 = vmatmul.mubr.f32.gmra.mxu0 %v687
        %v843 = vpop.f32.mrf.mxu0
        %v844 = vadd.f32 %v710, %v843
        %v845 = vpop.f32.mrf.mxu0
        %846 = vmatprep.mubr.f32.mxu0 0.0
        %847 = vmatmul.mubr.f32.gmra.mxu0 %v688
        %v848 = vpop.f32.mrf.mxu0
        %v849 = vadd.f32 %v710, %v848
        %v850 = vpop.f32.mrf.mxu0
        %851 = vmatprep.mubr.f32.mxu0 0.0
        %852 = vmatmul.mubr.f32.gmra.mxu0 %v689
        %v853 = vpop.f32.mrf.mxu0
        %v854 = vadd.f32 %v710, %v853
        %v855 = vpop.f32.mrf.mxu0
        %856 = vmatprep.mubr.f32.mxu0 0.0
        %857 = vmatmul.mubr.f32.gmra.mxu0 %v690
        %v858 = vpop.f32.mrf.mxu0
        %v859 = vadd.f32 %v710, %v858
        %v860 = vpop.f32.mrf.mxu0
        %861 = vmatprep.mubr.f32.mxu0 0.0
        %862 = vmatmul.mubr.f32.gmra.mxu0 %v691
        %v863 = vpop.f32.mrf.mxu0
        %v864 = vadd.f32 %v710, %v863
        %v865 = vpop.f32.mrf.mxu0
        %866 = vmatprep.mubr.f32.mxu0 0.0
        %867 = vmatmul.mubr.f32.gmra.mxu0 %v692
        %v868 = vpop.f32.mrf.mxu0
        %v869 = vadd.f32 %v710, %v868
        %v870 = vpop.f32.mrf.mxu0
        %871 = vmatprep.mubr.f32.mxu0 0.0
        %872 = vmatmul.mubr.f32.gmra.mxu0 %v693
        %v873 = vpop.f32.mrf.mxu0
        %v874 = vadd.f32 %v710, %v873
        %v875 = vpop.f32.mrf.mxu0
        %876 = vmatprep.mubr.f32.mxu0 0.0
        %877 = vmatmul.mubr.f32.gmra.mxu0 %v694
        %v878 = vpop.f32.mrf.mxu0
        %v879 = vadd.f32 %v710, %v878
        %v880 = vpop.f32.mrf.mxu0
        %881 = vmatprep.mubr.f32.mxu0 0.0
        %882 = vmatmul.mubr.f32.gmra.mxu0 %v695
        %v883 = vpop.f32.mrf.mxu0
        %v884 = vadd.f32 %v710, %v883
        %v885 = vpop.f32.mrf.mxu0
        %886 = vmatprep.mubr.f32.mxu0 0.0
        %887 = vmatmul.mubr.f32.gmra.mxu0 %v696
        %v888 = vpop.f32.mrf.mxu0
        %v889 = vadd.f32 %v710, %v888
        %v890 = vpop.f32.mrf.mxu0
        %891 = vmatprep.mubr.f32.mxu0 0.0
        %892 = vmatmul.mubr.f32.gmra.mxu0 %v697
        %v893 = vpop.f32.mrf.mxu0
        %v894 = vadd.f32 %v710, %v893
        %v895 = vpop.f32.mrf.mxu0
        %896 = vmatprep.mubr.f32.mxu0 0.0
        %897 = vmatmul.mubr.f32.gmra.mxu0 %v698
        %v898 = vpop.f32.mrf.mxu0
        %v899 = vadd.f32 %v710, %v898
        %v900 = vpop.f32.mrf.mxu0
        %901 = vmatprep.mubr.f32.mxu0 0.0
        %902 = vmatmul.mubr.f32.gmra.mxu0 %v699
        %v903 = vpop.f32.mrf.mxu0
        %v904 = vadd.f32 %v710, %v903
        %v905 = vpop.f32.mrf.mxu0
        %906 = vmatprep.mubr.f32.mxu0 0.0
        %907 = vmatmul.mubr.f32.gmra.mxu0 %v700
        %v908 = vpop.f32.mrf.mxu0
        %v909 = vadd.f32 %v710, %v908
        %v910 = vpop.f32.mrf.mxu0
        %911 = vmatprep.mubr.f32.mxu0 0.0
        %912 = vmatmul.mubr.f32.gmra.mxu0 %v701
        %v913 = vpop.f32.mrf.mxu0
        %v914 = vadd.f32 %v710, %v913
        %v915 = vpop.f32.mrf.mxu0
        %916 = vmatprep.mubr.f32.mxu0 0.0
        %917 = vmatmul.mubr.f32.gmra.mxu0 %v702
        %v918 = vpop.f32.mrf.mxu0
        %v919 = vadd.f32 %v710, %v918
        %v920 = vpop.f32.mrf.mxu0
        %921 = vmatprep.mubr.f32.mxu0 0.0
        %922 = vmatmul.mubr.f32.gmra.mxu0 %v703
        %v923 = vpop.f32.mrf.mxu0
        %v924 = vadd.f32 %v710, %v923
        %v925 = vpop.f32.mrf.mxu0
        %926 = vmatprep.mubr.f32.mxu0 0.0
        %927 = vmatmul.mubr.f32.gmra.mxu0 %v704
        %v928 = vpop.f32.mrf.mxu0
        %v929 = vadd.f32 %v710, %v928
        %v930 = vpop.f32.mrf.mxu0
        %931 = vmatprep.mubr.f32.mxu0 0.0
        %932 = vmatmul.mubr.f32.gmra.mxu0 %v705
        %v933 = vpop.f32.mrf.mxu0
        %v934 = vadd.f32 %v710, %v933
        %v935 = vpop.f32.mrf.mxu0
        %936 = vdwg.mxu0
        %937 = vst [vmem:[%s362] sm:$0xff] %v779
        %938 = vst [vmem:[%s362 + $0x8] sm:$0xff] %v784
        %939 = vst [vmem:[%s362 + $0x10] sm:$0xff] %v789
        %940 = vst [vmem:[%s362 + $0x18] sm:$0xff] %v794
        %941 = vst [vmem:[%s362 + $0x20] sm:$0xff] %v799
        %942 = vst [vmem:[%s362 + $0x28] sm:$0xff] %v804
        %943 = vst [vmem:[%s362 + $0x30] sm:$0xff] %v809
        %944 = vst [vmem:[%s362 + $0x38] sm:$0xff] %v814
        %945 = vst [vmem:[%s362 + $0x40] sm:$0xff] %v819
        %946 = vst [vmem:[%s362 + $0x48] sm:$0xff] %v824
        %947 = vst [vmem:[%s362 + $0x50] sm:$0xff] %v829
        %948 = vst [vmem:[%s362 + $0x58] sm:$0xff] %v834
        %949 = vst [vmem:[%s362 + $0x60] sm:$0xff] %v839
        %950 = vst [vmem:[%s362 + $0x68] sm:$0xff] %v844
        %951 = vst [vmem:[%s362 + $0x70] sm:$0xff] %v849
        %952 = vst [vmem:[%s362 + $0x78] sm:$0xff] %v854
        %953 = vst [vmem:[%s362 + $0x80] sm:$0xff] %v859
        %954 = vst [vmem:[%s362 + $0x88] sm:$0xff] %v864
        %955 = vst [vmem:[%s362 + $0x90] sm:$0xff] %v869
        %956 = vst [vmem:[%s362 + $0x98] sm:$0xff] %v874
        %957 = vst [vmem:[%s362 + $0xa0] sm:$0xff] %v879
        %958 = vst [vmem:[%s362 + $0xa8] sm:$0xff] %v884
        %959 = vst [vmem:[%s362 + $0xb0] sm:$0xff] %v889
        %960 = vst [vmem:[%s362 + $0xb8] sm:$0xff] %v894
        %961 = vst [vmem:[%s362 + $0xc0] sm:$0xff] %v899
        %962 = vst [vmem:[%s362 + $0xc8] sm:$0xff] %v904
        %963 = vst [vmem:[%s362 + $0xd0] sm:$0xff] %v909
        %964 = vst [vmem:[%s362 + $0xd8] sm:$0xff] %v914
        %965 = vst [vmem:[%s362 + $0xe0] sm:$0xff] %v919
        %966 = vst [vmem:[%s362 + $0xe8] sm:$0xff] %v924
        %967 = vst [vmem:[%s362 + $0xf0] sm:$0xff] %v929
        %968 = vst [vmem:[%s362 + $0xf8] sm:$0xff] %v934
        %s969 = sand.u32 %s176, 1
        %s970 = scalar_lea.sflag [#allocation6], %s969
        %s971 = sand.u32 %s176, 1
        %s972 = smul.addr %s971, 256
        %s973 = scalar_lea.vmem [#allocation10], %s972
        // Predicated region
        $region53: #{tpu_custom_call.1} parent=39 // pred_check
          %p974 = pneg %p186
        $region54: #{tpu_custom_call.1} parent=39 // pred_check_branch
          %976 = sbr.rel (%p974) target = $region56
        $region55: #{tpu_custom_call.1} parent=39 // pred_region
          %s977 = smul.u32 32, %s30
          %s979 = ssub.s32 4096, 4096
          %980 = vsyncadd %s970, %s979
          %s981 = smul.addr %s977, 128
          %s982 = scalar_lea.hbm %s6, %s981
          %s983 = sshll.u32 %s973, 4
          %s984 = int_to_ptr.vmem [resolvable:$true] %s983
          %989 = dma.vmem_to_hbm [thread:$0]  %s984, 4096, %s982, %s970, 128, 128, 8
        $region56: #{tpu_custom_call.1} parent=39 // pred_fallthru
          _
      $region40: #{tpu_custom_call.1} parent=5 // pred_fallthru
        _
      %p990 = scmp.le.s32.totalorder 2, %s25
      // Predicated region
      $region57: #{tpu_custom_call.1} parent=5 // pred_check
        %p991 = pneg %p990
      $region58: #{tpu_custom_call.1} parent=5 // pred_check_branch
        %993 = sbr.rel (%p991) target = $region60
      $region59: #{tpu_custom_call.1} parent=5 // pred_region
        %s994 = ssub.s32 %s25, 2
        // Predicated region
        $region61: #{tpu_custom_call.1} parent=59 // pred_check
          %p995 = pneg %p192
        $region62: #{tpu_custom_call.1} parent=59 // pred_check_branch
          %997 = sbr.rel (%p995) target = $region64
        $region63: #{tpu_custom_call.1} parent=59 // pred_region
          %s998 = sand.u32 %s177, 1
          %s999 = scalar_lea.sflag [#allocation6], %s998
          %s1000 = sand.u32 %s177, 1
          %s1001 = smul.addr %s1000, 256
          %s1002 = scalar_lea.vmem [#allocation10], %s1001
          %1003 = dma.done %s999, 4096
        $region64: #{tpu_custom_call.1} parent=59 // pred_fallthru
          _
      $region60: #{tpu_custom_call.1} parent=5 // pred_fallthru
        _
    $region6: #{tpu_custom_call.1} parent=1 // loop_footer
      %s29 = sadd.s32 1, %s25
    $region7: #{tpu_custom_call.1} parent=1 // loop_footer_branch
      %24 = sbr.rel target = $region3
    $region8: #{tpu_custom_call.1} parent=1 // loop_exit
      _
    %1004 = vsyncpa [#allocation5], 1
    %s1005 = scalar_lea.sflag [#allocation5], 1
    %1006 = vsyncpa %s1005, 1
    %1007 = vsyncpa [#allocation8], 1
    %s1008 = scalar_lea.sflag [#allocation8], 1
    %1009 = vsyncpa %s1008, 1
    %1010 = vsyncpa [#allocation6], 1
    %s1011 = scalar_lea.sflag [#allocation6], 1
    %1012 = vsyncpa %s1011, 1

</llo_original>
